<compile_context>
chip_gen: v7x
topology: tpu7x:2x2x1
jax: 0.10.0
libtpu: 0.0.40
codegen_flags: <defaults>
</compile_context>

<pallas_src>
import math

import jax
import jax.numpy as jnp
from jax import lax
from jax.experimental import pallas as pl
from jax.experimental.pallas import tpu as pltpu

NEG = -1000000.0


def _rpr_attn_kernel(vl_ref,                      # (1, tq, 1)  int32 per-row valid len
                     q_ref, k_ref, v_ref,         # (1, tq, D), (1, K, D), (1, K, Dv)
                     pk_ref, pv_ref,              # (tq, K, D), (tq, K, Dv)
                     out_ref):                    # (1, tq, Dv)
    D = q_ref.shape[2]
    scale = 1.0 / math.sqrt(D)

    # Fold the 1/sqrt(d) scale into the queries once (both score terms are linear in q).
    q = q_ref[0] * scale                                             # (tq, D)
    k = k_ref[0]                                                     # (K, D)
    v = v_ref[0]                                                     # (K, Dv)

    # Content scores: q @ k^T on the MXU (contract last dims, no explicit transpose).
    scores = lax.dot_general(q, k, (((1,), (1,)), ((), ())),
                             preferred_element_type=jnp.float32)     # (tq, K)

    # RPR key scores: scores_pos[q, k] = sum_d q[q, d] * pos_k[q, k, d]
    # (VPU multiply + XLU lane reduce; avoids degenerate vector-per-batch dots.)
    scores = scores + jnp.sum(q[:, None, :] * pk_ref[...], axis=-1)  # (tq, K)

    # masked_softmax with a per-(batch, query)-row valid length.
    vl = vl_ref[0]                                                   # (tq, 1) int32
    col = lax.broadcasted_iota(jnp.int32, scores.shape, 1)           # (tq, K)
    scores = jnp.where(col < vl, scores, NEG)

    # Numerically-stable softmax with deferred normalization.
    m = jnp.max(scores, axis=-1, keepdims=True)                      # (tq, 1)
    e = jnp.exp(scores - m)                                          # (tq, K) unnormalized
    inv_l = pl.reciprocal(jnp.sum(e, axis=-1, keepdims=True),
                          approx=True)                               # (tq, 1)

    # NOTE: dropout on the attention weights is an inference-mode identity here.

    # Content output: e @ v on the MXU.
    out = jnp.dot(e, v, preferred_element_type=jnp.float32)          # (tq, Dv)

    # RPR value output: out_pos[q, d] = sum_k e[q, k] * pos_v[q, k, d]
    out = out + jnp.sum(e[:, :, None] * pv_ref[...], axis=1)         # (tq, Dv)

    # Apply the softmax denominator once, per row.
    out_ref[0] = (out * inv_l).astype(out_ref.dtype)


def _pick_tq(Q, max_tq=128):
    """Largest query tile <= max_tq that keeps blocks legal (multiple of 8 or == Q)."""
    if Q <= max_tq:
        return Q
    for t in range(max_tq, 7, -1):
        if Q % t == 0 and t % 8 == 0:
            return t
    return Q


def dot_product_attention_with_rpr(queries, keys, values, pos_k, pos_v,
                                   valid_lens=None):
    B, Q, D = queries.shape
    K = keys.shape[1]
    Dv = values.shape[-1]

    # Normalize valid_lens to a (B, Q, 1) int32 tensor of per-row lengths
    # (mirrors masked_softmax: 1-D lengths are repeated per query row).
    if valid_lens is None:
        vl = jnp.full((B, Q, 1), K, dtype=jnp.int32)
    elif valid_lens.ndim == 1:
        vl = jnp.broadcast_to(valid_lens.astype(jnp.int32)[:, None, None], (B, Q, 1))
    else:
        vl = valid_lens.astype(jnp.int32).reshape(B, Q, 1)

    tq = _pick_tq(Q)
    nq = Q // tq

    # Batch is the innermost grid axis so the (large, batch-shared) pos_k / pos_v
    # blocks keep the same block index across it and are not re-DMA'd per batch.
    grid_spec = pltpu.PrefetchScalarGridSpec(
        num_scalar_prefetch=0,
        grid=(nq, B),
        in_specs=[
            pl.BlockSpec((1, tq, 1), lambda qi, b: (b, qi, 0)),    # valid lens
            pl.BlockSpec((1, tq, D), lambda qi, b: (b, qi, 0)),    # queries
            pl.BlockSpec((1, K, D), lambda qi, b: (b, 0, 0)),      # keys
            pl.BlockSpec((1, K, Dv), lambda qi, b: (b, 0, 0)),     # values
            pl.BlockSpec((tq, K, D), lambda qi, b: (qi, 0, 0)),    # pos_k (shared)
            pl.BlockSpec((tq, K, Dv), lambda qi, b: (qi, 0, 0)),   # pos_v (shared)
        ],
        out_specs=pl.BlockSpec((1, tq, Dv), lambda qi, b: (b, qi, 0)),
    )

    return pl.pallas_call(
        _rpr_attn_kernel,
        out_shape=jax.ShapeDtypeStruct((B, Q, Dv), queries.dtype),
        grid_spec=grid_spec,
        compiler_params=pltpu.CompilerParams(
            dimension_semantics=("parallel", "parallel")),
    )(vl, queries, keys, values, pos_k, pos_v)


# ---------------- pure-JAX reference (mirrors the PyTorch code literally) ----------------
def reference(queries, keys, values, pos_k, pos_v, valid_lens=None):
    d = queries.shape[-1]
    scores = jnp.einsum("bqd,bkd->bqk", queries, keys)
    scores_pos = jnp.einsum("bqd,qkd->bqk", queries, pos_k)
    scores = (scores + scores_pos) / math.sqrt(d)

    if valid_lens is None:
        w = jax.nn.softmax(scores, axis=-1)
    else:
        B, Q, K = scores.shape
        if valid_lens.ndim == 1:
            vlr = jnp.repeat(valid_lens, Q)                   # (B*Q,)
        else:
            vlr = valid_lens.reshape(-1)                      # (B*Q,)
        mask = jnp.arange(K)[None, :] < vlr[:, None]
        s = jnp.where(mask, scores.reshape(-1, K), NEG)
        w = jax.nn.softmax(s.reshape(B, Q, K), axis=-1)

    output = jnp.einsum("bqk,bkd->bqd", w, values)
    output_pos = jnp.einsum("bqk,qkd->bqd", w, pos_v)
    return output + output_pos


if __name__ == "__main__":
    B, Q, K = 2, 8, 16
    D = Dv = 32

    key = jax.random.PRNGKey(0)
    k0, k1, k2, k3, k4, k5 = jax.random.split(key, 6)

    queries = jax.random.normal(k0, (B, Q, D), jnp.float32)
    keys = jax.random.normal(k1, (B, K, D), jnp.float32)
    values = jax.random.normal(k2, (B, K, Dv), jnp.float32)
    pos_k = jax.random.normal(k3, (Q, K, D), jnp.float32)
    pos_v = jax.random.normal(k4, (Q, K, Dv), jnp.float32)

    # 1-D (per-batch) valid_lens
    valid_lens = jnp.array([5, 16], dtype=jnp.int32)
    out = jax.block_until_ready(
        dot_product_attention_with_rpr(queries, keys, values, pos_k, pos_v, valid_lens))
    assert out.shape == (B, Q, Dv)
    ref = reference(queries, keys, values, pos_k, pos_v, valid_lens)
    max_err = float(jnp.max(jnp.abs(out - ref)))
    if not jnp.allclose(out, ref, atol=1e-2, rtol=1e-2):
        raise AssertionError(f"kernel/reference mismatch (1-D lens), max abs err = {max_err}")

    # valid_lens=None path
    out2 = jax.block_until_ready(
        dot_product_attention_with_rpr(queries, keys, values, pos_k, pos_v, None))
    ref2 = reference(queries, keys, values, pos_k, pos_v, None)
    if not jnp.allclose(out2, ref2, atol=1e-2, rtol=1e-2):
        raise AssertionError("kernel/reference mismatch for valid_lens=None")

    # 2-D (per-batch, per-query) valid_lens path
    valid_lens_2d = jax.random.randint(k5, (B, Q), 1, K + 1).astype(jnp.int32)
    out3 = jax.block_until_ready(
        dot_product_attention_with_rpr(queries, keys, values, pos_k, pos_v, valid_lens_2d))
    ref3 = reference(queries, keys, values, pos_k, pos_v, valid_lens_2d)
    if not jnp.allclose(out3, ref3, atol=1e-2, rtol=1e-2):
        raise AssertionError("kernel/reference mismatch for 2-D valid_lens")

    print("KERNEL_OK")
</pallas_src>

<mosaic_0001>
module attributes {stable_mosaic.version = 11 : i64} {
  func.func @_rpr_attn_kernel(%arg0: i32, %arg1: i32, %arg2: memref<1x8x1xi32, #tpu.memory_space<vmem>>, %arg3: memref<1x8x32xf32, #tpu.memory_space<vmem>>, %arg4: memref<1x16x32xf32, #tpu.memory_space<vmem>>, %arg5: memref<1x16x32xf32, #tpu.memory_space<vmem>>, %arg6: memref<8x16x32xf32, #tpu.memory_space<vmem>>, %arg7: memref<8x16x32xf32, #tpu.memory_space<vmem>>, %arg8: memref<1x8x32xf32, #tpu.memory_space<vmem>>) attributes {dimension_semantics = [#tpu.dimension_semantics<parallel>, #tpu.dimension_semantics<parallel>], iteration_bounds = array<i64: 1, 2>, scalar_prefetch = 0 : i64, scratch_operands = 0 : i64, tpu.core_type = #tpu.core_type<tc>, window_params = [{transform_indices = @transform_0, window_bounds = array<i64: 1, 8, 1>}, {transform_indices = @transform_1, window_bounds = array<i64: 1, 8, 32>}, {transform_indices = @transform_2, window_bounds = array<i64: 1, 16, 32>}, {transform_indices = @transform_3, window_bounds = array<i64: 1, 16, 32>}, {transform_indices = @transform_4, window_bounds = array<i64: 8, 16, 32>}, {transform_indices = @transform_5, window_bounds = array<i64: 8, 16, 32>}, {transform_indices = @transform_6, window_bounds = array<i64: 1, 8, 32>}]} {
    %c0 = arith.constant 0 : index
    %c0_0 = arith.constant 0 : index
    %c0_1 = arith.constant 0 : index
    %0 = vector.load %arg3[%c0, %c0_0, %c0_1] : memref<1x8x32xf32, #tpu.memory_space<vmem>>, vector<1x8x32xf32>
    %1 = vector.shape_cast %0 : vector<1x8x32xf32> to vector<8x32xf32>
    %cst = arith.constant 0.176776692 : f32
    %2 = vector.broadcast %cst : f32 to vector<8x32xf32>
    %3 = arith.mulf %1, %2 : vector<8x32xf32>
    %c0_2 = arith.constant 0 : index
    %c0_3 = arith.constant 0 : index
    %c0_4 = arith.constant 0 : index
    %4 = vector.load %arg4[%c0_2, %c0_3, %c0_4] : memref<1x16x32xf32, #tpu.memory_space<vmem>>, vector<1x16x32xf32>
    %5 = vector.shape_cast %4 : vector<1x16x32xf32> to vector<16x32xf32>
    %c0_5 = arith.constant 0 : index
    %c0_6 = arith.constant 0 : index
    %c0_7 = arith.constant 0 : index
    %6 = vector.load %arg5[%c0_5, %c0_6, %c0_7] : memref<1x16x32xf32, #tpu.memory_space<vmem>>, vector<1x16x32xf32>
    %7 = vector.shape_cast %6 : vector<1x16x32xf32> to vector<16x32xf32>
    %cst_8 = arith.constant dense<0.000000e+00> : vector<8x16xf32>
    %8 = tpu.matmul %3, %5, %cst_8 {dimension_numbers = #tpu.dot_dimension_numbers<[1], [1], [0], [0], [0, 0, 1, 0], [], []>} : vector<8x32xf32>, vector<16x32xf32>, vector<8x16xf32> -> vector<8x16xf32>
    %9 = vector.shape_cast %3 : vector<8x32xf32> to vector<8x1x32xf32>
    %c0_9 = arith.constant 0 : index
    %c0_10 = arith.constant 0 : index
    %c0_11 = arith.constant 0 : index
    %10 = vector.load %arg6[%c0_9, %c0_10, %c0_11] : memref<8x16x32xf32, #tpu.memory_space<vmem>>, vector<8x16x32xf32>
    %11 = vector.broadcast %9 : vector<8x1x32xf32> to vector<8x16x32xf32>
    %12 = arith.mulf %11, %10 : vector<8x16x32xf32>
    %cst_12 = arith.constant dense<0.000000e+00> : vector<8x16xf32>
    %13 = vector.multi_reduction <add>, %12, %cst_12 [2] : vector<8x16x32xf32> to vector<8x16xf32>
    %14 = arith.addf %8, %13 : vector<8x16xf32>
    %c0_13 = arith.constant 0 : index
    %c0_14 = arith.constant 0 : index
    %c0_15 = arith.constant 0 : index
    %15 = vector.load %arg2[%c0_13, %c0_14, %c0_15] : memref<1x8x1xi32, #tpu.memory_space<vmem>>, vector<1x8x1xi32>
    %16 = vector.shape_cast %15 : vector<1x8x1xi32> to vector<8x1xi32>
    %17 = tpu.iota {dimensions = array<i32: 1>} : vector<8x16xi32>
    %18 = vector.broadcast %16 : vector<8x1xi32> to vector<8x16xi32>
    %19 = arith.cmpi slt, %17, %18 : vector<8x16xi32>
    %cst_16 = arith.constant -1.000000e+06 : f32
    %20 = vector.broadcast %cst_16 : f32 to vector<8x16xf32>
    %21 = arith.select %19, %14, %20 : vector<8x16xi1>, vector<8x16xf32>
    %cst_17 = arith.constant dense<0xFF800000> : vector<8xf32>
    %22 = vector.multi_reduction <maximumf>, %21, %cst_17 [1] : vector<8x16xf32> to vector<8xf32>
    %23 = vector.shape_cast %22 : vector<8xf32> to vector<8x1xf32>
    %24 = vector.broadcast %23 : vector<8x1xf32> to vector<8x16xf32>
    %25 = arith.subf %21, %24 : vector<8x16xf32>
    %26 = math.exp %25 : vector<8x16xf32>
    %cst_18 = arith.constant dense<0.000000e+00> : vector<8xf32>
    %27 = vector.multi_reduction <add>, %26, %cst_18 [1] : vector<8x16xf32> to vector<8xf32>
    %28 = vector.shape_cast %27 : vector<8xf32> to vector<8x1xf32>
    %29 = tpu.reciprocal %28 {approx = true} : vector<8x1xf32> -> vector<8x1xf32>
    %cst_19 = arith.constant dense<0.000000e+00> : vector<8x32xf32>
    %30 = tpu.matmul %26, %7, %cst_19 {dimension_numbers = #tpu.dot_dimension_numbers<[1], [0], [0], [1], [0, 0, 1, 1], [], []>} : vector<8x16xf32>, vector<16x32xf32>, vector<8x32xf32> -> vector<8x32xf32>
    %31 = vector.shape_cast %26 : vector<8x16xf32> to vector<8x16x1xf32>
    %c0_20 = arith.constant 0 : index
    %c0_21 = arith.constant 0 : index
    %c0_22 = arith.constant 0 : index
    %32 = vector.load %arg7[%c0_20, %c0_21, %c0_22] : memref<8x16x32xf32, #tpu.memory_space<vmem>>, vector<8x16x32xf32>
    %33 = vector.broadcast %31 : vector<8x16x1xf32> to vector<8x16x32xf32>
    %34 = arith.mulf %33, %32 : vector<8x16x32xf32>
    %cst_23 = arith.constant dense<0.000000e+00> : vector<8x32xf32>
    %35 = vector.multi_reduction <add>, %34, %cst_23 [1] : vector<8x16x32xf32> to vector<8x32xf32>
    %36 = arith.addf %30, %35 : vector<8x32xf32>
    %37 = vector.broadcast %29 : vector<8x1xf32> to vector<8x32xf32>
    %38 = arith.mulf %36, %37 : vector<8x32xf32>
    %c0_24 = arith.constant 0 : index
    %c0_25 = arith.constant 0 : index
    %c0_26 = arith.constant 0 : index
    %39 = vector.load %arg8[%c0_24, %c0_25, %c0_26] : memref<1x8x32xf32, #tpu.memory_space<vmem>>, vector<1x8x32xf32>
    %40 = vector.shape_cast %39 : vector<1x8x32xf32> to vector<8x32xf32>
    %41 = vector.shape_cast %38 : vector<8x32xf32> to vector<1x8x32xf32>
    tpu.vector_store %arg8[%c0_24, %c0_25, %c0_26], %41 {strides = array<i32>} : memref<1x8x32xf32, #tpu.memory_space<vmem>>, vector<1x8x32xf32>,
    return
  }
  func.func @transform_0(%arg0: i32, %arg1: i32) -> (i32, i32, i32) {
    %c0_i32 = arith.constant 0 : i32
    %c0_i32_0 = arith.constant 0 : i32
    return %arg1, %arg0, %c0_i32 : i32, i32, i32
  }
  func.func @transform_1(%arg0: i32, %arg1: i32) -> (i32, i32, i32) {
    %c0_i32 = arith.constant 0 : i32
    %c0_i32_0 = arith.constant 0 : i32
    return %arg1, %arg0, %c0_i32 : i32, i32, i32
  }
  func.func @transform_2(%arg0: i32, %arg1: i32) -> (i32, i32, i32) {
    %c0_i32 = arith.constant 0 : i32
    %c0_i32_0 = arith.constant 0 : i32
    %c0_i32_1 = arith.constant 0 : i32
    return %arg1, %c0_i32, %c0_i32_0 : i32, i32, i32
  }
  func.func @transform_3(%arg0: i32, %arg1: i32) -> (i32, i32, i32) {
    %c0_i32 = arith.constant 0 : i32
    %c0_i32_0 = arith.constant 0 : i32
    %c0_i32_1 = arith.constant 0 : i32
    return %arg1, %c0_i32, %c0_i32_0 : i32, i32, i32
  }
  func.func @transform_4(%arg0: i32, %arg1: i32) -> (i32, i32, i32) {
    %c0_i32 = arith.constant 0 : i32
    %c0_i32_0 = arith.constant 0 : i32
    %c0_i32_1 = arith.constant 0 : i32
    return %arg0, %c0_i32, %c0_i32_0 : i32, i32, i32
  }
  func.func @transform_5(%arg0: i32, %arg1: i32) -> (i32, i32, i32) {
    %c0_i32 = arith.constant 0 : i32
    %c0_i32_0 = arith.constant 0 : i32
    %c0_i32_1 = arith.constant 0 : i32
    return %arg0, %c0_i32, %c0_i32_0 : i32, i32, i32
  }
  func.func @transform_6(%arg0: i32, %arg1: i32) -> (i32, i32, i32) {
    %c0_i32 = arith.constant 0 : i32
    %c0_i32_0 = arith.constant 0 : i32
    return %arg1, %arg0, %c0_i32 : i32, i32, i32
  }
}

</mosaic_0001>

<llo_original>
// kernel: tpu_custom_call.1
$region0: #{tpu_custom_call.1}
  #allocation0 [shape = 'u32[]', space=smem, size = 0x4, offset = 0x4, fixed_abs, tag = 'smem constant byte address 0x4 - core index']
  #allocation1 [shape = 'u32[144,128]{1,0:T(1,128)}', space=vmem, size = 0x12000, scoped, tag = 'internal scratch']
  %s0 = inlined_call_operand.vmem [shape: s32[2,8,1], index: 0, kind: input, shape index: {}]
  %s1 = inlined_call_operand.vmem [shape: f32[2,8,32], index: 1, kind: input, shape index: {}]
  %s2 = inlined_call_operand.hbm [shape: f32[2,16,32], index: 2, kind: input, shape index: {}]
  %s3 = inlined_call_operand.hbm [shape: f32[2,16,32], index: 3, kind: input, shape index: {}]
  %s4 = inlined_call_operand.hbm [shape: f32[8,16,32], index: 4, kind: input, shape index: {}]
  %s5 = inlined_call_operand.hbm [shape: f32[8,16,32], index: 5, kind: input, shape index: {}]
  %s6 = inlined_call_operand.hbm [shape: f32[2,8,32], index: 6, kind: output, shape index: {}]
  %s7 = sld [smem:[#allocation0]]
  $region73: #{tpu_custom_call.1} parent=0
    _
  %s9 = ssub.s32 1, %s7
  %s10 = scalar_select 0, %s9, %s7
  $region1: #{tpu_custom_call.1} parent=0
    #allocation2 [shape = 'u8[16384]{0}', space=vmem, size = 0x4000, scoped, tag = 'input window, operand 2']
    #allocation3 [shape = 's32[2]{0}', space=sflag, size = 0x8, scoped, tag = 'scoped memory for tpu_custom_call.1']
    #allocation4 [shape = 's32[2]{0}', space=sflag, size = 0x8, scoped, tag = 'scoped memory for tpu_custom_call.1']
    #allocation5 [shape = 'u8[16384]{0}', space=vmem, size = 0x4000, scoped, tag = 'input window, operand 3']
    #allocation6 [shape = 's32[2]{0}', space=sflag, size = 0x8, scoped, tag = 'scoped memory for tpu_custom_call.1']
    #allocation7 [shape = 'u8[65536]{0}', space=vmem, size = 0x10000, scoped, tag = 'input window, operand 4, single buffered']
    #allocation8 [shape = 'u8[65536]{0}', space=vmem, size = 0x10000, scoped, tag = 'input window, operand 5, single buffered']
    #allocation9 [shape = 's32[1]{0}', space=sflag, size = 0x4, scoped, tag = 'scoped memory for tpu_custom_call.1']
    #allocation10 [shape = 'u8[8192]{0}', space=vmem, size = 0x2000, scoped, tag = 'output window, operand 0']
    %11 = vsyncpa [#allocation3], 0
    %s12 = scalar_lea.sflag [#allocation3], 1
    %13 = vsyncpa %s12, 0
    %14 = vsyncpa [#allocation6], 0
    %s15 = scalar_lea.sflag [#allocation6], 1
    %16 = vsyncpa %s15, 0
    %17 = vsyncpa [#allocation9], 0
    %18 = vsyncpa [#allocation4], 0
    %s19 = scalar_lea.sflag [#allocation4], 1
    %20 = vsyncpa %s19, 0
    loop: start=0, step=1, limit=4
    $region2: #{tpu_custom_call.1} parent=1 // loop_pre_header
      _
    $region3: #{tpu_custom_call.1} parent=1 // loop_header
      %s22 = sphi 0, %s26
      %p23 = scmp.ge.s32.totalorder %s22, 4
      %s29 = sphi 0, %s41
      %s30 = sphi 0, %s37
      %s31 = sphi 0, %s29
      %s32 = sphi 0, %s30
      %s33 = sphi 0, %s31
      %s34 = sphi 0, %s32
      %s46 = sphi 0, %s48
      %s49 = sphi 0, %s46
      %s50 = sphi 0, %s49
      %s66 = sphi 0, %s50
      %s74 = sphi 0, %s76
      %s77 = sphi 0, %s74
      %s78 = sphi 0, %s77
      %s94 = sphi 0, %s78
      %s100 = sphi 0, %s102
      %s103 = sphi 0, %s100
      %s104 = sphi 0, %s103
      %s120 = sphi 0, %s104
      %s126 = sphi 0, %s128
      %s129 = sphi 0, %s126
      %s130 = sphi 0, %s129
      %s146 = sphi 0, %s130
      %s152 = sphi 0, %s154
      %s155 = sphi 0, %s152
      %s156 = sphi 0, %s155
      %s172 = sphi 0, %s156
      %s178 = sphi 0, %s180
      %s181 = sphi 0, %s178
      %s182 = sphi 0, %s181
      %s198 = sphi 0, %s182
      %s206 = sphi 0, %s208
      %s209 = sphi 0, %s206
      %s210 = sphi 0, %s209
      %s226 = sphi 0, %s210
    $region4: #{tpu_custom_call.1} parent=1 // loop_header_branch
      %25 = sbr.rel (%p23) target = $region8
    $region5: #{tpu_custom_call.1} parent=1 // loop_body
      %s27 = ssub.s32 %s22, 1
      %s28 = ssub.s32 %s22, 2
      %s35 = sadd.s32 1, %s30
      %p36 = scmp.ge.s32.totalorder %s35, 2
      %s37 = scalar_select %p36, 0, %s35
      %s38 = sadd.s32 1, %s29
      %s39 = scalar_select %p36, %s38, %s29
      %p40 = scmp.ge.s32.totalorder %s39, 1
      %s41 = scalar_select %p40, 0, %s39
      %s42 = ssub.s32 %s30, %s37
      %s43 = ssub.s32 %s29, %s41
      %s44 = sor.u32 %s42, %s43
      %p45 = scmp.eq.s32.totalorder %s44, 0
      %s47 = sadd.s32 %s46, 1
      %s48 = scalar_select %p45, %s46, %s47
      %p51 = pneg %p45
      %p52 = scmp.eq.s32.totalorder %s22, 1
      %p53 = por %p51, %p52
      %p54 = scmp.ne.s32.totalorder %s46, %s49
      %p55 = scmp.eq.s32.totalorder %s22, 0
      %p56 = por %p54, %p55
      %p57 = scmp.ne.s32.totalorder %s46, %s49
      %p58 = scmp.eq.s32.totalorder %s27, 1
      %p59 = por %p57, %p58
      %p60 = scmp.ne.s32.totalorder %s49, %s50
      %p61 = scmp.eq.s32.totalorder %s27, 0
      %p62 = por %p60, %p61
      %p63 = scmp.ne.s32.totalorder %s49, %s50
      %p64 = scmp.eq.s32.totalorder %s28, 1
      %p65 = por %p63, %p64
      %p67 = scmp.ne.s32.totalorder %s50, %s66
      %p68 = scmp.eq.s32.totalorder %s28, 0
      %p69 = por %p67, %p68
      %s70 = ssub.s32 %s30, %s37
      %s71 = ssub.s32 %s29, %s41
      %s72 = sor.u32 %s70, %s71
      %p73 = scmp.eq.s32.totalorder %s72, 0
      %s75 = sadd.s32 %s74, 1
      %s76 = scalar_select %p73, %s74, %s75
      %p79 = pneg %p73
      %p80 = scmp.eq.s32.totalorder %s22, 1
      %p81 = por %p79, %p80
      %p82 = scmp.ne.s32.totalorder %s74, %s77
      %p83 = scmp.eq.s32.totalorder %s22, 0
      %p84 = por %p82, %p83
      %p85 = scmp.ne.s32.totalorder %s74, %s77
      %p86 = scmp.eq.s32.totalorder %s27, 1
      %p87 = por %p85, %p86
      %p88 = scmp.ne.s32.totalorder %s77, %s78
      %p89 = scmp.eq.s32.totalorder %s27, 0
      %p90 = por %p88, %p89
      %p91 = scmp.ne.s32.totalorder %s77, %s78
      %p92 = scmp.eq.s32.totalorder %s28, 1
      %p93 = por %p91, %p92
      %p95 = scmp.ne.s32.totalorder %s78, %s94
      %p96 = scmp.eq.s32.totalorder %s28, 0
      %p97 = por %p95, %p96
      %s98 = ssub.s32 %s30, %s37
      %p99 = scmp.eq.s32.totalorder %s98, 0
      %s101 = sadd.s32 %s100, 1
      %s102 = scalar_select %p99, %s100, %s101
      %p105 = pneg %p99
      %p106 = scmp.eq.s32.totalorder %s22, 1
      %p107 = por %p105, %p106
      %p108 = scmp.ne.s32.totalorder %s100, %s103
      %p109 = scmp.eq.s32.totalorder %s22, 0
      %p110 = por %p108, %p109
      %p111 = scmp.ne.s32.totalorder %s100, %s103
      %p112 = scmp.eq.s32.totalorder %s27, 1
      %p113 = por %p111, %p112
      %p114 = scmp.ne.s32.totalorder %s103, %s104
      %p115 = scmp.eq.s32.totalorder %s27, 0
      %p116 = por %p114, %p115
      %p117 = scmp.ne.s32.totalorder %s103, %s104
      %p118 = scmp.eq.s32.totalorder %s28, 1
      %p119 = por %p117, %p118
      %p121 = scmp.ne.s32.totalorder %s104, %s120
      %p122 = scmp.eq.s32.totalorder %s28, 0
      %p123 = por %p121, %p122
      %s124 = ssub.s32 %s30, %s37
      %p125 = scmp.eq.s32.totalorder %s124, 0
      %s127 = sadd.s32 %s126, 1
      %s128 = scalar_select %p125, %s126, %s127
      %p131 = pneg %p125
      %p132 = scmp.eq.s32.totalorder %s22, 1
      %p133 = por %p131, %p132
      %p134 = scmp.ne.s32.totalorder %s126, %s129
      %p135 = scmp.eq.s32.totalorder %s22, 0
      %p136 = por %p134, %p135
      %p137 = scmp.ne.s32.totalorder %s126, %s129
      %p138 = scmp.eq.s32.totalorder %s27, 1
      %p139 = por %p137, %p138
      %p140 = scmp.ne.s32.totalorder %s129, %s130
      %p141 = scmp.eq.s32.totalorder %s27, 0
      %p142 = por %p140, %p141
      %p143 = scmp.ne.s32.totalorder %s129, %s130
      %p144 = scmp.eq.s32.totalorder %s28, 1
      %p145 = por %p143, %p144
      %p147 = scmp.ne.s32.totalorder %s130, %s146
      %p148 = scmp.eq.s32.totalorder %s28, 0
      %p149 = por %p147, %p148
      %s150 = ssub.s32 %s29, %s41
      %p151 = scmp.eq.s32.totalorder %s150, 0
      %s153 = sadd.s32 %s152, 1
      %s154 = scalar_select %p151, %s152, %s153
      %p157 = pneg %p151
      %p158 = scmp.eq.s32.totalorder %s22, 1
      %p159 = por %p157, %p158
      %p160 = scmp.ne.s32.totalorder %s152, %s155
      %p161 = scmp.eq.s32.totalorder %s22, 0
      %p162 = por %p160, %p161
      %p163 = scmp.ne.s32.totalorder %s152, %s155
      %p164 = scmp.eq.s32.totalorder %s27, 1
      %p165 = por %p163, %p164
      %p166 = scmp.ne.s32.totalorder %s155, %s156
      %p167 = scmp.eq.s32.totalorder %s27, 0
      %p168 = por %p166, %p167
      %p169 = scmp.ne.s32.totalorder %s155, %s156
      %p170 = scmp.eq.s32.totalorder %s28, 1
      %p171 = por %p169, %p170
      %p173 = scmp.ne.s32.totalorder %s156, %s172
      %p174 = scmp.eq.s32.totalorder %s28, 0
      %p175 = por %p173, %p174
      %s176 = ssub.s32 %s29, %s41
      %p177 = scmp.eq.s32.totalorder %s176, 0
      %s179 = sadd.s32 %s178, 1
      %s180 = scalar_select %p177, %s178, %s179
      %p183 = pneg %p177
      %p184 = scmp.eq.s32.totalorder %s22, 1
      %p185 = por %p183, %p184
      %p186 = scmp.ne.s32.totalorder %s178, %s181
      %p187 = scmp.eq.s32.totalorder %s22, 0
      %p188 = por %p186, %p187
      %p189 = scmp.ne.s32.totalorder %s178, %s181
      %p190 = scmp.eq.s32.totalorder %s27, 1
      %p191 = por %p189, %p190
      %p192 = scmp.ne.s32.totalorder %s181, %s182
      %p193 = scmp.eq.s32.totalorder %s27, 0
      %p194 = por %p192, %p193
      %p195 = scmp.ne.s32.totalorder %s181, %s182
      %p196 = scmp.eq.s32.totalorder %s28, 1
      %p197 = por %p195, %p196
      %p199 = scmp.ne.s32.totalorder %s182, %s198
      %p200 = scmp.eq.s32.totalorder %s28, 0
      %p201 = por %p199, %p200
      %s202 = ssub.s32 %s30, %s37
      %s203 = ssub.s32 %s29, %s41
      %s204 = sor.u32 %s202, %s203
      %p205 = scmp.eq.s32.totalorder %s204, 0
      %s207 = sadd.s32 %s206, 1
      %s208 = scalar_select %p205, %s206, %s207
      %p211 = pneg %p205
      %p212 = scmp.eq.s32.totalorder %s22, 1
      %p213 = por %p211, %p212
      %p214 = scmp.ne.s32.totalorder %s206, %s209
      %p215 = scmp.eq.s32.totalorder %s22, 0
      %p216 = por %p214, %p215
      %p217 = scmp.ne.s32.totalorder %s206, %s209
      %p218 = scmp.eq.s32.totalorder %s27, 1
      %p219 = por %p217, %p218
      %p220 = scmp.ne.s32.totalorder %s209, %s210
      %p221 = scmp.eq.s32.totalorder %s27, 0
      %p222 = por %p220, %p221
      %p223 = scmp.ne.s32.totalorder %s209, %s210
      %p224 = scmp.eq.s32.totalorder %s28, 1
      %p225 = por %p223, %p224
      %p227 = scmp.ne.s32.totalorder %s210, %s226
      %p228 = scmp.eq.s32.totalorder %s28, 0
      %p229 = por %p227, %p228
      %p230 = scmp.le.s32.totalorder 1, %s22
      %p231 = scmp.lt.s32.totalorder %s22, 3
      %p232 = pnand %p230, %p231
      %p233 = pneg %p232
      // Predicated region
      $region9: #{tpu_custom_call.1} parent=5 // pred_check
        _
      $region10: #{tpu_custom_call.1} parent=5 // pred_check_branch
        %235 = sbr.rel (%p232) target = $region12
      $region11: #{tpu_custom_call.1} parent=5 // pred_region
        %s236 = ssub.s32 %s22, 1
        // Predicated region
        $region13: #{tpu_custom_call.1} parent=11 // pred_check
          %p237 = pneg %p168
        $region14: #{tpu_custom_call.1} parent=11 // pred_check_branch
          %239 = sbr.rel (%p237) target = $region16
        $region15: #{tpu_custom_call.1} parent=11 // pred_region
          %s240 = smul.u32 8, %s31
          %s242 = ssub.s32 2048, 2048
          %243 = vsyncadd [#allocation6], %s242
          %s244 = smul.addr %s240, 2
          %s245 = smul.addr %s244, 128
          %s246 = scalar_lea.hbm %s4, %s245
          %s247 = sshll.u32 [#allocation7], 4
          %s248 = int_to_ptr.vmem [resolvable:$true] %s247
          %253 = dma.hbm_to_vmem [thread:$0]  %s246, 2048, %s248, [#allocation6], 128, 128, 8
        $region16: #{tpu_custom_call.1} parent=11 // pred_fallthru
          _
        // Predicated region
        $region17: #{tpu_custom_call.1} parent=11 // pred_check
          %p254 = pneg %p194
        $region18: #{tpu_custom_call.1} parent=11 // pred_check_branch
          %256 = sbr.rel (%p254) target = $region20
        $region19: #{tpu_custom_call.1} parent=11 // pred_region
          %s257 = smul.u32 8, %s31
          %s259 = ssub.s32 2048, 2048
          %260 = vsyncadd [#allocation9], %s259
          %s261 = smul.addr %s257, 2
          %s262 = smul.addr %s261, 128
          %s263 = scalar_lea.hbm %s5, %s262
          %s264 = sshll.u32 [#allocation8], 4
          %s265 = int_to_ptr.vmem [resolvable:$true] %s264
          %270 = dma.hbm_to_vmem [thread:$0]  %s263, 2048, %s265, [#allocation9], 128, 128, 8
        $region20: #{tpu_custom_call.1} parent=11 // pred_fallthru
          _
      $region12: #{tpu_custom_call.1} parent=5 // pred_fallthru
        _
      %p271 = scmp.lt.s32.totalorder %s22, 2
      // Predicated region
      $region21: #{tpu_custom_call.1} parent=5 // pred_check
        %p272 = pneg %p271
      $region22: #{tpu_custom_call.1} parent=5 // pred_check_branch
        %274 = sbr.rel (%p272) target = $region24
      $region23: #{tpu_custom_call.1} parent=5 // pred_region
        // Predicated region
        $region25: #{tpu_custom_call.1} parent=23 // pred_check
          %p275 = pneg %p56
        $region26: #{tpu_custom_call.1} parent=23 // pred_check_branch
          %277 = sbr.rel (%p275) target = $region28
        $region27: #{tpu_custom_call.1} parent=23 // pred_region
          %p278 = scmp.lt.s32.totalorder %s30, 1
          %s279 = scalar_select %p278, %s30, 1
          %p280 = scmp.lt.s32.totalorder %s29, 0
          %s281 = scalar_select %p280, %s29, 0
          %s282 = sadd.s32 %s281, %s279
          %s283 = smul.addr %s282, 8
          %s284 = scalar_lea.vmem %s0, %s283
        $region28: #{tpu_custom_call.1} parent=23 // pred_fallthru
          _
        // Predicated region
        $region29: #{tpu_custom_call.1} parent=23 // pred_check
          %p285 = pneg %p84
        $region30: #{tpu_custom_call.1} parent=23 // pred_check_branch
          %287 = sbr.rel (%p285) target = $region32
        $region31: #{tpu_custom_call.1} parent=23 // pred_region
          %p288 = scmp.lt.s32.totalorder %s30, 1
          %s289 = scalar_select %p288, %s30, 1
          %p290 = scmp.lt.s32.totalorder %s29, 0
          %s291 = scalar_select %p290, %s29, 0
          %s292 = sadd.s32 %s291, %s289
          %s293 = smul.addr %s292, 8
          %s294 = scalar_lea.vmem %s1, %s293
        $region32: #{tpu_custom_call.1} parent=23 // pred_fallthru
          _
        // Predicated region
        $region33: #{tpu_custom_call.1} parent=23 // pred_check
          %p295 = pneg %p110
        $region34: #{tpu_custom_call.1} parent=23 // pred_check_branch
          %297 = sbr.rel (%p295) target = $region36
        $region35: #{tpu_custom_call.1} parent=23 // pred_region
          %s298 = sand.u32 %s100, 1
          %s299 = scalar_lea.sflag [#allocation3], %s298
          %s300 = sand.u32 %s100, 1
          %s301 = smul.addr %s300, 16
          %s302 = scalar_lea.vmem [#allocation2], %s301
          %s304 = ssub.s32 256, 256
          %305 = vsyncadd %s299, %s304
          %s306 = smul.addr %s30, 2
          %s307 = smul.addr %s306, 128
          %s308 = scalar_lea.hbm %s2, %s307
          %s309 = sshll.u32 %s302, 4
          %s310 = int_to_ptr.vmem [resolvable:$true] %s309
          %315 = dma.hbm_to_vmem [thread:$0]  %s308, 256, %s310, %s299, 128, 128, 8
        $region36: #{tpu_custom_call.1} parent=23 // pred_fallthru
          _
        // Predicated region
        $region37: #{tpu_custom_call.1} parent=23 // pred_check
          %p316 = pneg %p136
        $region38: #{tpu_custom_call.1} parent=23 // pred_check_branch
          %318 = sbr.rel (%p316) target = $region40
        $region39: #{tpu_custom_call.1} parent=23 // pred_region
          %s319 = sand.u32 %s22, 1
          %s320 = scalar_lea.sflag [#allocation6], %s319
          %s321 = sand.u32 %s126, 1
          %s322 = smul.addr %s321, 16
          %s323 = scalar_lea.vmem [#allocation5], %s322
          %s325 = ssub.s32 256, 256
          %326 = vsyncadd %s320, %s325
          %s327 = smul.addr %s30, 2
          %s328 = smul.addr %s327, 128
          %s329 = scalar_lea.hbm %s3, %s328
          %s330 = sshll.u32 %s323, 4
          %s331 = int_to_ptr.vmem [resolvable:$true] %s330
          %336 = dma.hbm_to_vmem [thread:$0]  %s329, 256, %s331, %s320, 128, 128, 8
        $region40: #{tpu_custom_call.1} parent=23 // pred_fallthru
          _
      $region24: #{tpu_custom_call.1} parent=5 // pred_fallthru
        _
      %p337 = scmp.le.s32.totalorder 1, %s22
      %p338 = scmp.lt.s32.totalorder %s22, 3
      %p339 = pnand %p337, %p338
      %p340 = pneg %p339
      // Predicated region
      $region41: #{tpu_custom_call.1} parent=5 // pred_check
        _
      $region42: #{tpu_custom_call.1} parent=5 // pred_check_branch
        %342 = sbr.rel (%p339) target = $region44
      $region43: #{tpu_custom_call.1} parent=5 // pred_region
        %s343 = ssub.s32 %s22, 1
        %s344 = sand.u32 %s103, 1
        %s345 = scalar_lea.sflag [#allocation3], %s344
        %s346 = sand.u32 %s103, 1
        %s347 = smul.addr %s346, 16
        %s348 = scalar_lea.vmem [#allocation2], %s347
        // Predicated region
        $region45: #{tpu_custom_call.1} parent=43 // pred_check
          %p349 = pneg %p116
        $region46: #{tpu_custom_call.1} parent=43 // pred_check_branch
          %351 = sbr.rel (%p349) target = $region48
        $region47: #{tpu_custom_call.1} parent=43 // pred_region
          %352 = dma.done %s345, 256
        $region48: #{tpu_custom_call.1} parent=43 // pred_fallthru
          _
        %s353 = sand.u32 %s27, 1
        %s354 = scalar_lea.sflag [#allocation6], %s353
        %s355 = sand.u32 %s129, 1
        %s356 = smul.addr %s355, 16
        %s357 = scalar_lea.vmem [#allocation5], %s356
        // Predicated region
        $region49: #{tpu_custom_call.1} parent=43 // pred_check
          %p358 = pneg %p142
        $region50: #{tpu_custom_call.1} parent=43 // pred_check_branch
          %360 = sbr.rel (%p358) target = $region52
        $region51: #{tpu_custom_call.1} parent=43 // pred_region
          %361 = dma.done %s354, 256
        $region52: #{tpu_custom_call.1} parent=43 // pred_fallthru
          _
        // Predicated region
        $region53: #{tpu_custom_call.1} parent=43 // pred_check
          %p362 = pneg %p168
        $region54: #{tpu_custom_call.1} parent=43 // pred_check_branch
          %364 = sbr.rel (%p362) target = $region56
        $region55: #{tpu_custom_call.1} parent=43 // pred_region
          %365 = dma.done [#allocation6], 2048
        $region56: #{tpu_custom_call.1} parent=43 // pred_fallthru
          _
        // Predicated region
        $region57: #{tpu_custom_call.1} parent=43 // pred_check
          %p366 = pneg %p194
        $region58: #{tpu_custom_call.1} parent=43 // pred_check_branch
          %368 = sbr.rel (%p366) target = $region60
        $region59: #{tpu_custom_call.1} parent=43 // pred_region
          %369 = dma.done [#allocation9], 2048
        $region60: #{tpu_custom_call.1} parent=43 // pred_fallthru
          _
        %p370 = scmp.lt.s32.totalorder %s32, 1
        %s371 = scalar_select %p370, %s32, 1
        %p372 = scmp.lt.s32.totalorder %s31, 0
        %s373 = scalar_select %p372, %s31, 0
        %s374 = sadd.s32 %s373, %s371
        %s375 = smul.addr %s374, 8
        %s376 = scalar_lea.vmem %s0, %s375
        %p377 = pneg %p62
        %p378 = pneg %p59
        %p379 = scmp.lt.s32.totalorder %s32, 1
        %s380 = scalar_select %p379, %s32, 1
        %p381 = scmp.lt.s32.totalorder %s31, 0
        %s382 = scalar_select %p381, %s31, 0
        %s383 = sadd.s32 %s382, %s380
        %s384 = smul.addr %s383, 8
        %s385 = scalar_lea.vmem %s1, %s384
        %p386 = pneg %p90
        %p387 = pneg %p87
        %s388 = sand.u32 %s103, 1
        %s389 = scalar_lea.sflag [#allocation3], %s388
        %s390 = sand.u32 %s103, 1
        %s391 = smul.addr %s390, 16
        %s392 = scalar_lea.vmem [#allocation2], %s391
        %p393 = pneg %p116
        %p394 = pneg %p113
        %s395 = sand.u32 %s27, 1
        %s396 = scalar_lea.sflag [#allocation6], %s395
        %s397 = sand.u32 %s129, 1
        %s398 = smul.addr %s397, 16
        %s399 = scalar_lea.vmem [#allocation5], %s398
        %p400 = pneg %p142
        %p401 = pneg %p139
        %p402 = pneg %p168
        %p403 = pneg %p165
        %p404 = pneg %p194
        %p405 = pneg %p191
        %p406 = pneg %p222
        %p407 = pneg %p219
        %s408 = sand.u32 %s209, 1
        %s409 = scalar_lea.sflag [#allocation4], %s408
        %s410 = sand.u32 %s209, 1
        %s411 = smul.addr %s410, 8
        %s412 = scalar_lea.vmem [#allocation10], %s411
        %p413 = scmp.lt.s32.totalorder %s32, 1
        %s414 = scalar_select %p413, %s32, 1
        %p415 = scmp.lt.s32.totalorder %s31, 0
        %s416 = scalar_select %p415, %s31, 0
        %s417 = sadd.s32 %s416, %s414
        %s418 = smul.addr %s417, 8
        %s419 = scalar_lea.vmem %s0, %s418
        %p420 = scmp.lt.s32.totalorder %s32, 1
        %s421 = scalar_select %p420, %s32, 1
        %p422 = scmp.lt.s32.totalorder %s31, 0
        %s423 = scalar_select %p422, %s31, 0
        %s424 = sadd.s32 %s423, %s421
        %s425 = smul.addr %s424, 8
        %s426 = scalar_lea.vmem %s1, %s425
        %s427 = smul.u32 8, %s31
        %s428 = smul.u32 8, %s31
        %v429 = vld [vmem:[%s426] sm:$0xff]
        %v430 = vmul.f32 %v429, 0.17677669
        %v431 = vld [vmem:[%s348] sm:$0xff]
        %v432 = vld [vmem:[%s348 + $0x8] sm:$0xff]
        %v433 = vld [vmem:[%s357] sm:$0xff]
        %v434 = vld [vmem:[%s357 + $0x8] sm:$0xff]
        %v436 = vcombine.high %v430, %v430
        %v438 = vunpack.c.l.s4 1966171168
        %v439 = vunpack.c.0.s8 %v438
        %v440 = vlaneseq
        %v441 = vshrl.u32 %v440, 7
        %v442 = vsub.s32 %v439, %v441
        %v443 = vrot.slane %v430, %v442
        %v445 = vunpack.c.l.s4 1966171168
        %v446 = vunpack.c.0.s8 %v445
        %v447 = vlaneseq
        %v448 = vshrl.u32 %v447, 7
        %v449 = vsub.s32 %v446, %v448
        %v450 = vrot.slane %v436, %v449
        %v451 = vcombine.high %v443, %v443
        %v452 = vcombine.high %v450, %v450
        %v454 = vunpack.c.l.s4 1966171168
        %v455 = vunpack.c.0.s8 %v454
        %v456 = vlaneseq
        %v457 = vshrl.u32 %v456, 7
        %v458 = vsub.s32 %v455, %v457
        %v459 = vrot.slane %v443, %v458
        %v461 = vunpack.c.l.s4 1966171168
        %v462 = vunpack.c.0.s8 %v461
        %v463 = vlaneseq
        %v464 = vshrl.u32 %v463, 7
        %v465 = vsub.s32 %v462, %v464
        %v466 = vrot.slane %v450, %v465
        %v468 = vunpack.c.l.s4 1966171168
        %v469 = vunpack.c.0.s8 %v468
        %v470 = vlaneseq
        %v471 = vshrl.u32 %v470, 7
        %v472 = vsub.s32 %v469, %v471
        %v473 = vrot.slane %v451, %v472
        %v475 = vunpack.c.l.s4 1966171168
        %v476 = vunpack.c.0.s8 %v475
        %v477 = vlaneseq
        %v478 = vshrl.u32 %v477, 7
        %v479 = vsub.s32 %v476, %v478
        %v480 = vrot.slane %v452, %v479
        %v481 = vcombine.high %v459, %v459
        %v482 = vcombine.high %v466, %v466
        %v483 = vcombine.high %v473, %v473
        %v484 = vcombine.high %v480, %v480
        %v485 = vld [vmem:[#allocation7] sm:$0xff]
        %v486 = vld [vmem:[#allocation7 + $0x8] sm:$0xff]
        %v487 = vld [vmem:[#allocation7 + $0x10] sm:$0xff]
        %v488 = vld [vmem:[#allocation7 + $0x18] sm:$0xff]
        %v489 = vld [vmem:[#allocation7 + $0x20] sm:$0xff]
        %v490 = vld [vmem:[#allocation7 + $0x28] sm:$0xff]
        %v491 = vld [vmem:[#allocation7 + $0x30] sm:$0xff]
        %v492 = vld [vmem:[#allocation7 + $0x38] sm:$0xff]
        %v493 = vld [vmem:[#allocation7 + $0x40] sm:$0xff]
        %v494 = vld [vmem:[#allocation7 + $0x48] sm:$0xff]
        %v495 = vld [vmem:[#allocation7 + $0x50] sm:$0xff]
        %v496 = vld [vmem:[#allocation7 + $0x58] sm:$0xff]
        %v497 = vld [vmem:[#allocation7 + $0x60] sm:$0xff]
        %v498 = vld [vmem:[#allocation7 + $0x68] sm:$0xff]
        %v499 = vld [vmem:[#allocation7 + $0x70] sm:$0xff]
        %v500 = vld [vmem:[#allocation7 + $0x78] sm:$0xff]
        %v501 = vlaneseq
        %v502 = vshrl.u32 %v501, 7
        %v503 = vsub.s32 0, %v502
        %v504 = vrot.slane %v459, %v503
        %v505 = vlaneseq
        %v506 = vshrl.u32 %v505, 7
        %v507 = vsub.s32 0, %v506
        %v508 = vrot.slane %v473, %v507
        %v509 = vlaneseq
        %v510 = vshrl.u32 %v509, 7
        %v511 = vsub.s32 0, %v510
        %v512 = vrot.slane %v481, %v511
        %v513 = vlaneseq
        %v514 = vshrl.u32 %v513, 7
        %v515 = vsub.s32 0, %v514
        %v516 = vrot.slane %v483, %v515
        %v517 = vlaneseq
        %v518 = vshrl.u32 %v517, 7
        %v519 = vsub.s32 0, %v518
        %v520 = vrot.slane %v466, %v519
        %v521 = vlaneseq
        %v522 = vshrl.u32 %v521, 7
        %v523 = vsub.s32 0, %v522
        %v524 = vrot.slane %v480, %v523
        %v525 = vlaneseq
        %v526 = vshrl.u32 %v525, 7
        %v527 = vsub.s32 0, %v526
        %v528 = vrot.slane %v482, %v527
        %v529 = vlaneseq
        %v530 = vshrl.u32 %v529, 7
        %v531 = vsub.s32 0, %v530
        %v532 = vrot.slane %v484, %v531
        %v541 = vmul.f32 %v504, %v485
        %v542 = vmul.f32 %v504, %v486
        %v543 = vmul.f32 %v508, %v487
        %v544 = vmul.f32 %v508, %v488
        %v545 = vmul.f32 %v512, %v489
        %v546 = vmul.f32 %v512, %v490
        %v547 = vmul.f32 %v516, %v491
        %v548 = vmul.f32 %v516, %v492
        %v549 = vmul.f32 %v520, %v493
        %v550 = vmul.f32 %v520, %v494
        %v551 = vmul.f32 %v524, %v495
        %v552 = vmul.f32 %v524, %v496
        %v553 = vmul.f32 %v528, %v497
        %v554 = vmul.f32 %v528, %v498
        %v555 = vmul.f32 %v532, %v499
        %v556 = vmul.f32 %v532, %v500
        %vm557 = vcmask 261120
        %v558 = vsel %vm557, %v541, 0.0
        %559 = vadd.xlane.f32.xlu0 %v558
        %v560 = vpop.xlane.xlu0 %559
        %v561 = vsel %vm557, %v542, 0.0
        %562 = vadd.xlane.f32.xlu0 %v561
        %v563 = vpop.xlane.xlu0 %562
        %v564 = vsel %vm557, %v543, 0.0
        %565 = vadd.xlane.f32.xlu0 %v564
        %v566 = vpop.xlane.xlu0 %565
        %v567 = vsel %vm557, %v544, 0.0
        %568 = vadd.xlane.f32.xlu0 %v567
        %v569 = vpop.xlane.xlu0 %568
        %v570 = vsel %vm557, %v545, 0.0
        %571 = vadd.xlane.f32.xlu0 %v570
        %v572 = vpop.xlane.xlu0 %571
        %v573 = vsel %vm557, %v546, 0.0
        %574 = vadd.xlane.f32.xlu0 %v573
        %v575 = vpop.xlane.xlu0 %574
        %v576 = vsel %vm557, %v547, 0.0
        %577 = vadd.xlane.f32.xlu0 %v576
        %v578 = vpop.xlane.xlu0 %577
        %v579 = vsel %vm557, %v548, 0.0
        %580 = vadd.xlane.f32.xlu0 %v579
        %v581 = vpop.xlane.xlu0 %580
        %v582 = vsel %vm557, %v549, 0.0
        %583 = vadd.xlane.f32.xlu0 %v582
        %v584 = vpop.xlane.xlu0 %583
        %v585 = vsel %vm557, %v550, 0.0
        %586 = vadd.xlane.f32.xlu0 %v585
        %v587 = vpop.xlane.xlu0 %586
        %v588 = vsel %vm557, %v551, 0.0
        %589 = vadd.xlane.f32.xlu0 %v588
        %v590 = vpop.xlane.xlu0 %589
        %v591 = vsel %vm557, %v552, 0.0
        %592 = vadd.xlane.f32.xlu0 %v591
        %v593 = vpop.xlane.xlu0 %592
        %v594 = vsel %vm557, %v553, 0.0
        %595 = vadd.xlane.f32.xlu0 %v594
        %v596 = vpop.xlane.xlu0 %595
        %v597 = vsel %vm557, %v554, 0.0
        %598 = vadd.xlane.f32.xlu0 %v597
        %v599 = vpop.xlane.xlu0 %598
        %v600 = vsel %vm557, %v555, 0.0
        %601 = vadd.xlane.f32.xlu0 %v600
        %v602 = vpop.xlane.xlu0 %601
        %v603 = vsel %vm557, %v556, 0.0
        %604 = vadd.xlane.f32.xlu0 %v603
        %v605 = vpop.xlane.xlu0 %604
        %v622 = vlaneseq
        %v623 = vand.u32 %v622, 127
        %v624 = vlaneseq
        %v625 = vshrl.u32 %v624, 7
        %v626 = vsub.s32 %v623, %v625
        %v627 = vrot.slane %v560, %v626
        %v628 = vadd.s32 %v623, 4294967288
        %v629 = vlaneseq
        %v630 = vshrl.u32 %v629, 7
        %v631 = vsub.s32 %v628, %v630
        %v632 = vrot.slane %v563, %v631
        %vm633 = vcmask 130112
        %v634 = vsel %vm633, %v632, %v627
        %v635 = vlaneseq
        %v636 = vshrl.u32 %v635, 7
        %v637 = vsub.s32 %v623, %v636
        %v638 = vrot.slane %v566, %v637
        %v639 = vlaneseq
        %v640 = vshrl.u32 %v639, 7
        %v641 = vsub.s32 %v628, %v640
        %v642 = vrot.slane %v569, %v641
        %v643 = vsel %vm633, %v642, %v638
        %v644 = vlaneseq
        %v645 = vshrl.u32 %v644, 7
        %v646 = vsub.s32 %v623, %v645
        %v647 = vrot.slane %v572, %v646
        %v648 = vlaneseq
        %v649 = vshrl.u32 %v648, 7
        %v650 = vsub.s32 %v628, %v649
        %v651 = vrot.slane %v575, %v650
        %v652 = vsel %vm633, %v651, %v647
        %v653 = vlaneseq
        %v654 = vshrl.u32 %v653, 7
        %v655 = vsub.s32 %v623, %v654
        %v656 = vrot.slane %v578, %v655
        %v657 = vlaneseq
        %v658 = vshrl.u32 %v657, 7
        %v659 = vsub.s32 %v628, %v658
        %v660 = vrot.slane %v581, %v659
        %v661 = vsel %vm633, %v660, %v656
        %v662 = vlaneseq
        %v663 = vshrl.u32 %v662, 7
        %v664 = vsub.s32 %v623, %v663
        %v665 = vrot.slane %v584, %v664
        %v666 = vlaneseq
        %v667 = vshrl.u32 %v666, 7
        %v668 = vsub.s32 %v628, %v667
        %v669 = vrot.slane %v587, %v668
        %v670 = vsel %vm633, %v669, %v665
        %v671 = vlaneseq
        %v672 = vshrl.u32 %v671, 7
        %v673 = vsub.s32 %v623, %v672
        %v674 = vrot.slane %v590, %v673
        %v675 = vlaneseq
        %v676 = vshrl.u32 %v675, 7
        %v677 = vsub.s32 %v628, %v676
        %v678 = vrot.slane %v593, %v677
        %v679 = vsel %vm633, %v678, %v674
        %v680 = vlaneseq
        %v681 = vshrl.u32 %v680, 7
        %v682 = vsub.s32 %v623, %v681
        %v683 = vrot.slane %v596, %v682
        %v684 = vlaneseq
        %v685 = vshrl.u32 %v684, 7
        %v686 = vsub.s32 %v628, %v685
        %v687 = vrot.slane %v599, %v686
        %v688 = vsel %vm633, %v687, %v683
        %v689 = vlaneseq
        %v690 = vshrl.u32 %v689, 7
        %v691 = vsub.s32 %v623, %v690
        %v692 = vrot.slane %v602, %v691
        %v693 = vlaneseq
        %v694 = vshrl.u32 %v693, 7
        %v695 = vsub.s32 %v628, %v694
        %v696 = vrot.slane %v605, %v695
        %v697 = vsel %vm633, %v696, %v692
        %vm698 = vcmask 1041409
        %v699 = vsel %vm698, %v643, %v634
        %vm700 = vcmask 1042434
        %v701 = vsel %vm700, %v652, %v699
        %vm702 = vcmask 1043459
        %v703 = vsel %vm702, %v661, %v701
        %vm704 = vcmask 1044484
        %v705 = vsel %vm704, %v670, %v703
        %vm706 = vcmask 1045509
        %v707 = vsel %vm706, %v679, %v705
        %vm708 = vcmask 1046534
        %v709 = vsel %vm708, %v688, %v707
        %vm710 = vcmask 1047559
        %v711 = vsel %vm710, %v697, %v709
        %v713 = vsel %vm557, %v430, 0
        %v716 = vsel %vm557, %v431, 0
        %v719 = vsel %vm557, %v432, 0
        %721 = vmatprep.subr.mxu0 0.0
        %722 = vmatpush1.xpose.msra.mxu0 %v716
        %723 = vmatprep.subr.mxu0 0.0
        %724 = vmatpush1.xpose.msra.mxu0 %v719
        %725 = vmatprep.subr.mxu0 0.0
        %726 = vmatpush1.xpose.msra.mxu0 0.0
        %727 = vmatprep.subr.mxu0 0.0
        %728 = vmatpush1.xpose.msra.mxu0 0.0
        %729 = vmatprep.subr.mxu0 0.0
        %730 = vmatpush1.xpose.msra.mxu0 0.0
        %731 = vmatprep.subr.mxu0 0.0
        %732 = vmatpush1.xpose.msra.mxu0 0.0
        %733 = vmatprep.subr.mxu0 0.0
        %734 = vmatpush1.xpose.msra.mxu0 0.0
        %735 = vmatprep.subr.mxu0 0.0
        %736 = vmatpush1.xpose.msra.mxu0 0.0
        %737 = vmatprep.subr.mxu0 0.0
        %738 = vmatpush1.xpose.msra.mxu0 0.0
        %739 = vmatprep.subr.mxu0 0.0
        %740 = vmatpush1.xpose.msra.mxu0 0.0
        %741 = vmatprep.subr.mxu0 0.0
        %742 = vmatpush1.xpose.msra.mxu0 0.0
        %743 = vmatprep.subr.mxu0 0.0
        %744 = vmatpush1.xpose.msra.mxu0 0.0
        %745 = vmatprep.subr.mxu0 0.0
        %746 = vmatpush1.xpose.msra.mxu0 0.0
        %747 = vmatprep.subr.mxu0 0.0
        %748 = vmatpush1.xpose.msra.mxu0 0.0
        %749 = vmatprep.subr.mxu0 0.0
        %750 = vmatpush1.xpose.msra.mxu0 0.0
        %751 = vmatprep.subr.mxu0 0.0
        %752 = vmatpush1.xpose.msra.mxu0 0.0
        %753 = vmatprep.subr.mxu0 0.0
        %754 = vmatpush1.xpose.msra.mxu0 0.0
        %755 = vmatprep.subr.mxu0 0.0
        %756 = vmatpush1.xpose.msra.mxu0 0.0
        %757 = vmatprep.subr.mxu0 0.0
        %758 = vmatpush1.xpose.msra.mxu0 0.0
        %759 = vmatprep.subr.mxu0 0.0
        %760 = vmatpush1.xpose.msra.mxu0 0.0
        %761 = vmatprep.subr.mxu0 0.0
        %762 = vmatpush1.xpose.msra.mxu0 0.0
        %763 = vmatprep.subr.mxu0 0.0
        %764 = vmatpush1.xpose.msra.mxu0 0.0
        %765 = vmatprep.subr.mxu0 0.0
        %766 = vmatpush1.xpose.msra.mxu0 0.0
        %767 = vmatprep.subr.mxu0 0.0
        %768 = vmatpush1.xpose.msra.mxu0 0.0
        %769 = vmatprep.subr.mxu0 0.0
        %770 = vmatpush1.xpose.msra.mxu0 0.0
        %771 = vmatprep.subr.mxu0 0.0
        %772 = vmatpush1.xpose.msra.mxu0 0.0
        %773 = vmatprep.subr.mxu0 0.0
        %774 = vmatpush1.xpose.msra.mxu0 0.0
        %775 = vmatprep.subr.mxu0 0.0
        %776 = vmatpush1.xpose.msra.mxu0 0.0
        %777 = vmatprep.subr.mxu0 0.0
        %778 = vmatpush1.xpose.msra.mxu0 0.0
        %779 = vmatprep.subr.mxu0 0.0
        %780 = vmatpush1.xpose.msra.mxu0 0.0
        %781 = vmatprep.subr.mxu0 0.0
        %782 = vmatpush1.xpose.msra.mxu0 0.0
        %783 = vmatprep.subr.mxu0 0.0
        %784 = vmatpush1.xpose.msra.mxu0 0.0
        %785 = vmatprep.mubr.f32.mxu0 0.0
        %786 = vmatmul.mubr.f32.gmra.mrb[0].mxu0 %v713
        %v787 = vpop.f32.mrb[0].mxu0
        %v788 = vadd.f32 %v711, %v787
        %v789 = vpop.f32.mrb[0].mxu0
        %790 = vdwg.mxu0
        %v791 = vld [vmem:[%s419] sm:$0xff]
        %792 = vset.pattern.permute.xlu0 0
        %793 = vperm.xlu0 %792, %v791
        %v794 = vpop.permute.xlu0 %793
        %vm795 = vcmp.lt.s32.totalorder %v623, %v794
        %v796 = vsel %vm795, %v788, -1000000.0
        %vm797 = vcmask 130048
        %v798 = vsel %vm797, %v796, -inf
        %799 = vmax.xlane.f32.xlu0 %v798
        %v800 = vpop.xlane.xlu0 %799
        %v801 = vsub.f32 %v796, %v800
        %v802 = vmul.f32 %v801, 1.442695
        %v803 = vpow.pop %v802
        %v804 = vsel %vm797, %v803, 0.0
        %805 = vadd.xlane.f32.xlu0 %v804
        %v806 = vpop.xlane.xlu0 %805
        %v807 = vrcp.pop %v806
        %v808 = vlaneseq
        %v809 = vshrl.u32 %v808, 7
        %v810 = vsub.s32 0, %v809
        %v811 = vrot.slane %v803, %v810
        %813 = vbcast.lane.b32.xlu0 %v811, 256
        %v814 = vpop.permute.xlu0 %813
        %s816 = sor.u32 256, 8
        %817 = vbcast.lane.b32.xlu0 %v811, %s816
        %v818 = vpop.permute.xlu0 %817
        %v819 = vlaneseq
        %v820 = vshrl.u32 %v819, 7
        %v821 = vsub.s32 1, %v820
        %v822 = vrot.slane %v803, %v821
        %824 = vbcast.lane.b32.xlu0 %v822, 256
        %v825 = vpop.permute.xlu0 %824
        %s827 = sor.u32 256, 8
        %828 = vbcast.lane.b32.xlu0 %v822, %s827
        %v829 = vpop.permute.xlu0 %828
        %v830 = vlaneseq
        %v831 = vshrl.u32 %v830, 7
        %v832 = vsub.s32 2, %v831
        %v833 = vrot.slane %v803, %v832
        %835 = vbcast.lane.b32.xlu0 %v833, 256
        %v836 = vpop.permute.xlu0 %835
        %s838 = sor.u32 256, 8
        %839 = vbcast.lane.b32.xlu0 %v833, %s838
        %v840 = vpop.permute.xlu0 %839
        %v841 = vlaneseq
        %v842 = vshrl.u32 %v841, 7
        %v843 = vsub.s32 3, %v842
        %v844 = vrot.slane %v803, %v843
        %846 = vbcast.lane.b32.xlu0 %v844, 256
        %v847 = vpop.permute.xlu0 %846
        %s849 = sor.u32 256, 8
        %850 = vbcast.lane.b32.xlu0 %v844, %s849
        %v851 = vpop.permute.xlu0 %850
        %v852 = vlaneseq
        %v853 = vshrl.u32 %v852, 7
        %v854 = vsub.s32 4, %v853
        %v855 = vrot.slane %v803, %v854
        %857 = vbcast.lane.b32.xlu0 %v855, 256
        %v858 = vpop.permute.xlu0 %857
        %s860 = sor.u32 256, 8
        %861 = vbcast.lane.b32.xlu0 %v855, %s860
        %v862 = vpop.permute.xlu0 %861
        %v863 = vlaneseq
        %v864 = vshrl.u32 %v863, 7
        %v865 = vsub.s32 5, %v864
        %v866 = vrot.slane %v803, %v865
        %868 = vbcast.lane.b32.xlu0 %v866, 256
        %v869 = vpop.permute.xlu0 %868
        %s871 = sor.u32 256, 8
        %872 = vbcast.lane.b32.xlu0 %v866, %s871
        %v873 = vpop.permute.xlu0 %872
        %v874 = vlaneseq
        %v875 = vshrl.u32 %v874, 7
        %v876 = vsub.s32 6, %v875
        %v877 = vrot.slane %v803, %v876
        %879 = vbcast.lane.b32.xlu0 %v877, 256
        %v880 = vpop.permute.xlu0 %879
        %s882 = sor.u32 256, 8
        %883 = vbcast.lane.b32.xlu0 %v877, %s882
        %v884 = vpop.permute.xlu0 %883
        %v885 = vlaneseq
        %v886 = vshrl.u32 %v885, 7
        %v887 = vsub.s32 7, %v886
        %v888 = vrot.slane %v803, %v887
        %890 = vbcast.lane.b32.xlu0 %v888, 256
        %v891 = vpop.permute.xlu0 %890
        %s893 = sor.u32 256, 8
        %894 = vbcast.lane.b32.xlu0 %v888, %s893
        %v895 = vpop.permute.xlu0 %894
        %v896 = vld [vmem:[#allocation8] sm:$0xff]
        %v897 = vld [vmem:[#allocation8 + $0x8] sm:$0xff]
        %v898 = vld [vmem:[#allocation8 + $0x10] sm:$0xff]
        %v899 = vld [vmem:[#allocation8 + $0x18] sm:$0xff]
        %v900 = vld [vmem:[#allocation8 + $0x20] sm:$0xff]
        %v901 = vld [vmem:[#allocation8 + $0x28] sm:$0xff]
        %v902 = vld [vmem:[#allocation8 + $0x30] sm:$0xff]
        %v903 = vld [vmem:[#allocation8 + $0x38] sm:$0xff]
        %v904 = vld [vmem:[#allocation8 + $0x40] sm:$0xff]
        %v905 = vld [vmem:[#allocation8 + $0x48] sm:$0xff]
        %v906 = vld [vmem:[#allocation8 + $0x50] sm:$0xff]
        %v907 = vld [vmem:[#allocation8 + $0x58] sm:$0xff]
        %v908 = vld [vmem:[#allocation8 + $0x60] sm:$0xff]
        %v909 = vld [vmem:[#allocation8 + $0x68] sm:$0xff]
        %v910 = vld [vmem:[#allocation8 + $0x70] sm:$0xff]
        %v911 = vld [vmem:[#allocation8 + $0x78] sm:$0xff]
        %v912 = vmul.f32 %v814, %v896
        %v913 = vmul.f32 %v818, %v897
        %v914 = vmul.f32 %v825, %v898
        %v915 = vmul.f32 %v829, %v899
        %v916 = vmul.f32 %v836, %v900
        %v917 = vmul.f32 %v840, %v901
        %v918 = vmul.f32 %v847, %v902
        %v919 = vmul.f32 %v851, %v903
        %v920 = vmul.f32 %v858, %v904
        %v921 = vmul.f32 %v862, %v905
        %v922 = vmul.f32 %v869, %v906
        %v923 = vmul.f32 %v873, %v907
        %v924 = vmul.f32 %v880, %v908
        %v925 = vmul.f32 %v884, %v909
        %v926 = vmul.f32 %v891, %v910
        %v927 = vmul.f32 %v895, %v911
        %v928 = vsel %vm557, %v912, 0.0
        %v929 = vsel %vm557, %v913, 0.0
        %v930 = vadd.f32 %v928, %v929
        %v931 = vrot.slane %v930, 4
        %v932 = vadd.f32 %v930, %v931
        %v933 = vrot.slane %v932, 2
        %v934 = vadd.f32 %v932, %v933
        %v935 = vrot.slane %v934, 1
        %v936 = vadd.f32 %v934, %v935
        %v937 = vsel %vm557, %v914, 0.0
        %v938 = vsel %vm557, %v915, 0.0
        %v939 = vadd.f32 %v937, %v938
        %v940 = vrot.slane %v939, 4
        %v941 = vadd.f32 %v939, %v940
        %v942 = vrot.slane %v941, 2
        %v943 = vadd.f32 %v941, %v942
        %v944 = vrot.slane %v943, 1
        %v945 = vadd.f32 %v943, %v944
        %v946 = vsel %vm557, %v916, 0.0
        %v947 = vsel %vm557, %v917, 0.0
        %v948 = vadd.f32 %v946, %v947
        %v949 = vrot.slane %v948, 4
        %v950 = vadd.f32 %v948, %v949
        %v951 = vrot.slane %v950, 2
        %v952 = vadd.f32 %v950, %v951
        %v953 = vrot.slane %v952, 1
        %v954 = vadd.f32 %v952, %v953
        %v955 = vsel %vm557, %v918, 0.0
        %v956 = vsel %vm557, %v919, 0.0
        %v957 = vadd.f32 %v955, %v956
        %v958 = vrot.slane %v957, 4
        %v959 = vadd.f32 %v957, %v958
        %v960 = vrot.slane %v959, 2
        %v961 = vadd.f32 %v959, %v960
        %v962 = vrot.slane %v961, 1
        %v963 = vadd.f32 %v961, %v962
        %v964 = vsel %vm557, %v920, 0.0
        %v965 = vsel %vm557, %v921, 0.0
        %v966 = vadd.f32 %v964, %v965
        %v967 = vrot.slane %v966, 4
        %v968 = vadd.f32 %v966, %v967
        %v969 = vrot.slane %v968, 2
        %v970 = vadd.f32 %v968, %v969
        %v971 = vrot.slane %v970, 1
        %v972 = vadd.f32 %v970, %v971
        %v973 = vsel %vm557, %v922, 0.0
        %v974 = vsel %vm557, %v923, 0.0
        %v975 = vadd.f32 %v973, %v974
        %v976 = vrot.slane %v975, 4
        %v977 = vadd.f32 %v975, %v976
        %v978 = vrot.slane %v977, 2
        %v979 = vadd.f32 %v977, %v978
        %v980 = vrot.slane %v979, 1
        %v981 = vadd.f32 %v979, %v980
        %v982 = vsel %vm557, %v924, 0.0
        %v983 = vsel %vm557, %v925, 0.0
        %v984 = vadd.f32 %v982, %v983
        %v985 = vrot.slane %v984, 4
        %v986 = vadd.f32 %v984, %v985
        %v987 = vrot.slane %v986, 2
        %v988 = vadd.f32 %v986, %v987
        %v989 = vrot.slane %v988, 1
        %v990 = vadd.f32 %v988, %v989
        %v991 = vsel %vm557, %v926, 0.0
        %v992 = vsel %vm557, %v927, 0.0
        %v993 = vadd.f32 %v991, %v992
        %v994 = vrot.slane %v993, 4
        %v995 = vadd.f32 %v993, %v994
        %v996 = vrot.slane %v995, 2
        %v997 = vadd.f32 %v995, %v996
        %v998 = vrot.slane %v997, 1
        %v999 = vadd.f32 %v997, %v998
        %v1008 = vsel %vm698, %v945, %v936
        %v1009 = vsel %vm700, %v954, %v1008
        %v1010 = vsel %vm702, %v963, %v1009
        %v1011 = vsel %vm704, %v972, %v1010
        %v1012 = vsel %vm706, %v981, %v1011
        %v1013 = vsel %vm708, %v990, %v1012
        %v1014 = vsel %vm710, %v999, %v1013
        %v1017 = vsel %vm797, %v803, 0
        %1019 = vmatprep.subr.mxu0 0.0
        %1020 = vmatpush1.msra.mxu0 %v433
        %1021 = vmatprep.subr.mxu0 0.0
        %1022 = vmatpush1.msra.mxu0 %v434
        %1023 = vmatprep.subr.mxu0 0.0
        %1024 = vmatpush1.msra.mxu0 0.0
        %1025 = vmatprep.subr.mxu0 0.0
        %1026 = vmatpush1.msra.mxu0 0.0
        %1027 = vmatprep.subr.mxu0 0.0
        %1028 = vmatpush1.msra.mxu0 0.0
        %1029 = vmatprep.subr.mxu0 0.0
        %1030 = vmatpush1.msra.mxu0 0.0
        %1031 = vmatprep.subr.mxu0 0.0
        %1032 = vmatpush1.msra.mxu0 0.0
        %1033 = vmatprep.subr.mxu0 0.0
        %1034 = vmatpush1.msra.mxu0 0.0
        %1035 = vmatprep.subr.mxu0 0.0
        %1036 = vmatpush1.msra.mxu0 0.0
        %1037 = vmatprep.subr.mxu0 0.0
        %1038 = vmatpush1.msra.mxu0 0.0
        %1039 = vmatprep.subr.mxu0 0.0
        %1040 = vmatpush1.msra.mxu0 0.0
        %1041 = vmatprep.subr.mxu0 0.0
        %1042 = vmatpush1.msra.mxu0 0.0
        %1043 = vmatprep.subr.mxu0 0.0
        %1044 = vmatpush1.msra.mxu0 0.0
        %1045 = vmatprep.subr.mxu0 0.0
        %1046 = vmatpush1.msra.mxu0 0.0
        %1047 = vmatprep.subr.mxu0 0.0
        %1048 = vmatpush1.msra.mxu0 0.0
        %1049 = vmatprep.subr.mxu0 0.0
        %1050 = vmatpush1.msra.mxu0 0.0
        %1051 = vmatprep.subr.mxu0 0.0
        %1052 = vmatpush1.msra.mxu0 0.0
        %1053 = vmatprep.subr.mxu0 0.0
        %1054 = vmatpush1.msra.mxu0 0.0
        %1055 = vmatprep.subr.mxu0 0.0
        %1056 = vmatpush1.msra.mxu0 0.0
        %1057 = vmatprep.subr.mxu0 0.0
        %1058 = vmatpush1.msra.mxu0 0.0
        %1059 = vmatprep.subr.mxu0 0.0
        %1060 = vmatpush1.msra.mxu0 0.0
        %1061 = vmatprep.subr.mxu0 0.0
        %1062 = vmatpush1.msra.mxu0 0.0
        %1063 = vmatprep.subr.mxu0 0.0
        %1064 = vmatpush1.msra.mxu0 0.0
        %1065 = vmatprep.subr.mxu0 0.0
        %1066 = vmatpush1.msra.mxu0 0.0
        %1067 = vmatprep.subr.mxu0 0.0
        %1068 = vmatpush1.msra.mxu0 0.0
        %1069 = vmatprep.subr.mxu0 0.0
        %1070 = vmatpush1.msra.mxu0 0.0
        %1071 = vmatprep.subr.mxu0 0.0
        %1072 = vmatpush1.msra.mxu0 0.0
        %1073 = vmatprep.subr.mxu0 0.0
        %1074 = vmatpush1.msra.mxu0 0.0
        %1075 = vmatprep.subr.mxu0 0.0
        %1076 = vmatpush1.msra.mxu0 0.0
        %1077 = vmatprep.subr.mxu0 0.0
        %1078 = vmatpush1.msra.mxu0 0.0
        %1079 = vmatprep.subr.mxu0 0.0
        %1080 = vmatpush1.msra.mxu0 0.0
        %1081 = vmatprep.subr.mxu0 0.0
        %1082 = vmatpush1.msra.mxu0 0.0
        %1083 = vmatprep.mubr.f32.mxu0 0.0
        %1084 = vmatmul.mubr.f32.gmra.mrb[0].mxu0 %v1017
        %v1085 = vpop.f32.mrb[0].mxu0
        %v1086 = vadd.f32 %v1014, %v1085
        %v1087 = vpop.f32.mrb[0].mxu0
        %1088 = vdwg.mxu0
        %v1089 = vmul.f32 %v1086, %v807
        %1090 = vst.msk [vmem:[%s412] sm:$0xff] %vm557, %v1089
        %s1091 = sand.u32 %s209, 1
        %s1092 = scalar_lea.sflag [#allocation4], %s1091
        %s1093 = sand.u32 %s209, 1
        %s1094 = smul.addr %s1093, 8
        %s1095 = scalar_lea.vmem [#allocation10], %s1094
        // Predicated region
        $region61: #{tpu_custom_call.1} parent=43 // pred_check
          %p1096 = pneg %p219
        $region62: #{tpu_custom_call.1} parent=43 // pred_check_branch
          %1098 = sbr.rel (%p1096) target = $region64
        $region63: #{tpu_custom_call.1} parent=43 // pred_region
          %s1100 = ssub.s32 128, 128
          %1101 = vsyncadd %s1092, %s1100
          %s1102 = sadd.s32 %s31, %s32
          %s1103 = smul.addr %s1102, 128
          %s1104 = scalar_lea.hbm %s6, %s1103
          %s1106 = sshll.u32 %s1095, 4
          %s1107 = int_to_ptr.vmem [resolvable:$true] %s1106
          %1109 = dma.vmem_to_hbm [thread:$0]  %s1107, 128, %s1104, %s1092
        $region64: #{tpu_custom_call.1} parent=43 // pred_fallthru
          _
      $region44: #{tpu_custom_call.1} parent=5 // pred_fallthru
        _
      %p1110 = scmp.le.s32.totalorder 2, %s22
      // Predicated region
      $region65: #{tpu_custom_call.1} parent=5 // pred_check
        %p1111 = pneg %p1110
      $region66: #{tpu_custom_call.1} parent=5 // pred_check_branch
        %1113 = sbr.rel (%p1111) target = $region68
      $region67: #{tpu_custom_call.1} parent=5 // pred_region
        %s1114 = ssub.s32 %s22, 2
        // Predicated region
        $region69: #{tpu_custom_call.1} parent=67 // pred_check
          %p1115 = pneg %p225
        $region70: #{tpu_custom_call.1} parent=67 // pred_check_branch
          %1117 = sbr.rel (%p1115) target = $region72
        $region71: #{tpu_custom_call.1} parent=67 // pred_region
          %s1118 = sand.u32 %s210, 1
          %s1119 = scalar_lea.sflag [#allocation4], %s1118
          %s1120 = sand.u32 %s210, 1
          %s1121 = smul.addr %s1120, 8
          %s1122 = scalar_lea.vmem [#allocation10], %s1121
          %1123 = dma.done %s1119, 128
        $region72: #{tpu_custom_call.1} parent=67 // pred_fallthru
          _
      $region68: #{tpu_custom_call.1} parent=5 // pred_fallthru
        _
    $region6: #{tpu_custom_call.1} parent=1 // loop_footer
      %s26 = sadd.s32 1, %s22
    $region7: #{tpu_custom_call.1} parent=1 // loop_footer_branch
      %21 = sbr.rel target = $region3
    $region8: #{tpu_custom_call.1} parent=1 // loop_exit
      _
    %1124 = vsyncpa [#allocation3], 1
    %s1125 = scalar_lea.sflag [#allocation3], 1
    %1126 = vsyncpa %s1125, 1
    %1127 = vsyncpa [#allocation6], 1
    %s1128 = scalar_lea.sflag [#allocation6], 1
    %1129 = vsyncpa %s1128, 1
    %1130 = vsyncpa [#allocation9], 1
    %1131 = vsyncpa [#allocation4], 1
    %s1132 = scalar_lea.sflag [#allocation4], 1
    %1133 = vsyncpa %s1132, 1

</llo_original>
